<compile_context>
chip_gen: v7x
topology: tpu7x:2x2x1
jax: 0.10.0
libtpu: 0.0.40
codegen_flags: <defaults>
</compile_context>

<pallas_src>
import functools

import jax
import jax.numpy as jnp
from jax.experimental import pallas as pl
from jax.experimental.pallas import tpu as pltpu

_LANES = 128
_SUBLANES = 8


def _round_up(n, m):
    return ((n + m - 1) // m) * m


def _patch_attention_kernel(x_ref, w1_ref, b1_ref, w2_ref, b2_ref, out_ref):
    # x_ref : (TB, Pp)   io_dtype   (zero-padded activation tile)
    # w1_ref: (Pp, Hp)   io_dtype   (Linear1 weight, transposed + zero-padded)
    # b1_ref: (1, Hp)    float32
    # w2_ref: (Hp, Pp)   io_dtype   (Linear2 weight, transposed + zero-padded)
    # b2_ref: (1, Pp)    float32
    # out_ref: (TB, Pp)  io_dtype
    h = jnp.dot(x_ref[...], w1_ref[...],
                preferred_element_type=jnp.float32) + b1_ref[...]
    h = jnp.maximum(h, 0.0)                                    # ReLU (VPU)
    o = jnp.dot(h.astype(w2_ref.dtype), w2_ref[...],
                preferred_element_type=jnp.float32) + b2_ref[...]
    out_ref[...] = jax.nn.sigmoid(o).astype(out_ref.dtype)     # sigmoid (EUP)


def prepare_params(w1, b1, w2, b2, io_dtype=jnp.float32):
    """Transpose + zero-pad Linear params once, outside the per-call path.

    w1: (hidden, patches), b1: (hidden,), w2: (patches, hidden), b2: (patches,)
    Returns lane-padded (Pp = ceil128(patches), Hp = ceil128(hidden)) tensors.
    Zero padding guarantees the padded lanes contribute nothing to real outputs.
    """
    hidden, patches = w1.shape
    Pp = _round_up(patches, _LANES)
    Hp = _round_up(hidden, _LANES)
    w1_t = jnp.zeros((Pp, Hp), io_dtype).at[:patches, :hidden].set(
        w1.T.astype(io_dtype))
    b1_p = jnp.zeros((1, Hp), jnp.float32).at[0, :hidden].set(
        b1.astype(jnp.float32))
    w2_t = jnp.zeros((Hp, Pp), io_dtype).at[:hidden, :patches].set(
        w2.T.astype(io_dtype))
    b2_p = jnp.zeros((1, Pp), jnp.float32).at[0, :patches].set(
        b2.astype(jnp.float32))
    return w1_t, b1_p, w2_t, b2_p


@jax.jit
def patch_attention_forward(x, w1_t, b1_p, w2_t, b2_p):
    """x: (B, patches, 1, 1) NCHW.  Returns scale: (B, patches, 1, 1)."""
    B, P, H_, W_ = x.shape
    assert H_ == 1 and W_ == 1, "Patch_Attention expects H=W=1"
    Pp, Hp = w1_t.shape
    io_dtype = w1_t.dtype

    # Flatten + zero-pad to lane-dense (Bp, Pp) layout.
    TB = min(512, _round_up(B, _SUBLANES))          # batch tile (rows)
    Bp = _round_up(B, TB)
    x2d = x.reshape(B, P).astype(io_dtype)
    x_pad = jnp.zeros((Bp, Pp), io_dtype).at[:B, :P].set(x2d)

    itemsize = jnp.dtype(io_dtype).itemsize
    cost = pl.CostEstimate(
        flops=4 * Bp * Pp * Hp,                                  # two GEMMs
        transcendentals=Bp * Pp,                                 # sigmoid
        bytes_accessed=(2 * Bp * Pp * itemsize                   # x + out
                        + 2 * Pp * Hp * itemsize                 # weights
                        + 4 * (Pp + Hp)),                        # biases (f32)
    )

    grid = (Bp // TB,)
    out_pad = pl.pallas_call(
        _patch_attention_kernel,
        out_shape=jax.ShapeDtypeStruct((Bp, Pp), io_dtype),
        grid=grid,
        in_specs=[
            pl.BlockSpec((TB, Pp), lambda i: (i, 0)),    # x tile, pipelined
            pl.BlockSpec((Pp, Hp), lambda i: (0, 0)),    # w1: VMEM-resident
            pl.BlockSpec((1, Hp), lambda i: (0, 0)),     # b1: VMEM-resident
            pl.BlockSpec((Hp, Pp), lambda i: (0, 0)),    # w2: VMEM-resident
            pl.BlockSpec((1, Pp), lambda i: (0, 0)),     # b2: VMEM-resident
        ],
        out_specs=pl.BlockSpec((TB, Pp), lambda i: (i, 0)),
        compiler_params=pltpu.CompilerParams(
            dimension_semantics=("parallel",)),          # megacore on v7x
        cost_estimate=cost,
    )(x_pad, w1_t, b1_p, w2_t, b2_p)

    # Strip padding; unsqueeze(2).unsqueeze(3).expand_as(x) -> (B, P, 1, 1).
    return out_pad[:B, :P].astype(jnp.float32).reshape(B, P, 1, 1)


def init_params(key, patches=49, reduction_ratio=10):
    """Deterministic init matching nn.Linear default (uniform +-1/sqrt(fan_in))."""
    hidden = patches // reduction_ratio
    k1, k2, k3, k4 = jax.random.split(key, 4)
    bound1 = 1.0 / jnp.sqrt(patches)
    bound2 = 1.0 / jnp.sqrt(hidden)
    w1 = jax.random.uniform(k1, (hidden, patches), jnp.float32, -bound1, bound1)
    b1 = jax.random.uniform(k2, (hidden,), jnp.float32, -bound1, bound1)
    w2 = jax.random.uniform(k3, (patches, hidden), jnp.float32, -bound2, bound2)
    b2 = jax.random.uniform(k4, (patches,), jnp.float32, -bound2, bound2)
    return w1, b1, w2, b2


def reference_forward(x, w1, b1, w2, b2):
    """Pure-JAX reference of the PyTorch forward, for a sanity check."""
    B = x.shape[0]
    x2d = x.reshape(B, -1)
    h = jnp.maximum(x2d @ w1.T + b1, 0.0)
    o = h @ w2.T + b2
    return jax.nn.sigmoid(o).reshape(B, -1, 1, 1)


if __name__ == "__main__":
    key = jax.random.PRNGKey(0)
    kx, kp = jax.random.split(key)

    B, patches, reduction_ratio = 2, 49, 10
    x = jax.random.normal(kx, (B, patches, 1, 1), jnp.float32)
    w1, b1, w2, b2 = init_params(kp, patches, reduction_ratio)

    # Hoisted one-time parameter prep (transpose + lane padding).
    # For v6e/v7x deployment pass io_dtype=jnp.bfloat16 here to halve HBM traffic.
    w1_t, b1_p, w2_t, b2_p = prepare_params(w1, b1, w2, b2, io_dtype=jnp.float32)

    out = patch_attention_forward(x, w1_t, b1_p, w2_t, b2_p)
    out = jax.block_until_ready(out)

    ref = reference_forward(x, w1, b1, w2, b2)
    assert out.shape == (B, patches, 1, 1)
    assert jnp.allclose(out, ref, atol=1e-5, rtol=1e-5)

    print("KERNEL_OK")
</pallas_src>

<mosaic_0001>
module attributes {stable_mosaic.version = 11 : i64} {
  func.func @_patch_attention_kernel(%arg0: i32, %arg1: memref<8x128xf32, #tpu.memory_space<vmem>>, %arg2: memref<128x128xf32, #tpu.memory_space<vmem>>, %arg3: memref<1x128xf32, #tpu.memory_space<vmem>>, %arg4: memref<128x128xf32, #tpu.memory_space<vmem>>, %arg5: memref<1x128xf32, #tpu.memory_space<vmem>>, %arg6: memref<8x128xf32, #tpu.memory_space<vmem>>) attributes {dimension_semantics = [#tpu.dimension_semantics<parallel>], iteration_bounds = array<i64: 1>, scalar_prefetch = 0 : i64, scratch_operands = 0 : i64, tpu.core_type = #tpu.core_type<tc>, window_params = [{transform_indices = @transform_0, window_bounds = array<i64: 8, 128>}, {pipeline_mode = #tpu.pipeline_mode<synchronous>, transform_indices = @transform_1, window_bounds = array<i64: 128, 128>}, {pipeline_mode = #tpu.pipeline_mode<synchronous>, transform_indices = @transform_2, window_bounds = array<i64: 1, 128>}, {pipeline_mode = #tpu.pipeline_mode<synchronous>, transform_indices = @transform_3, window_bounds = array<i64: 128, 128>}, {pipeline_mode = #tpu.pipeline_mode<synchronous>, transform_indices = @transform_4, window_bounds = array<i64: 1, 128>}, {transform_indices = @transform_5, window_bounds = array<i64: 8, 128>}]} {
    %c0 = arith.constant 0 : index
    %c0_0 = arith.constant 0 : index
    %0 = vector.load %arg1[%c0, %c0_0] : memref<8x128xf32, #tpu.memory_space<vmem>>, vector<8x128xf32>
    %c0_1 = arith.constant 0 : index
    %c0_2 = arith.constant 0 : index
    %1 = vector.load %arg2[%c0_1, %c0_2] : memref<128x128xf32, #tpu.memory_space<vmem>>, vector<128x128xf32>
    %cst = arith.constant dense<0.000000e+00> : vector<8x128xf32>
    %2 = tpu.matmul %0, %1, %cst {dimension_numbers = #tpu.dot_dimension_numbers<[1], [0], [0], [1], [0, 0, 1, 1], [], []>} : vector<8x128xf32>, vector<128x128xf32>, vector<8x128xf32> -> vector<8x128xf32>
    %c0_3 = arith.constant 0 : index
    %c0_4 = arith.constant 0 : index
    %3 = vector.load %arg3[%c0_3, %c0_4] : memref<1x128xf32, #tpu.memory_space<vmem>>, vector<1x128xf32>
    %4 = vector.broadcast %3 : vector<1x128xf32> to vector<8x128xf32>
    %5 = arith.addf %2, %4 : vector<8x128xf32>
    %cst_5 = arith.constant 0.000000e+00 : f32
    %6 = vector.broadcast %cst_5 : f32 to vector<8x128xf32>
    %7 = arith.maximumf %5, %6 : vector<8x128xf32>
    %c0_6 = arith.constant 0 : index
    %c0_7 = arith.constant 0 : index
    %8 = vector.load %arg4[%c0_6, %c0_7] : memref<128x128xf32, #tpu.memory_space<vmem>>, vector<128x128xf32>
    %cst_8 = arith.constant dense<0.000000e+00> : vector<8x128xf32>
    %9 = tpu.matmul %7, %8, %cst_8 {dimension_numbers = #tpu.dot_dimension_numbers<[1], [0], [0], [1], [0, 0, 1, 1], [], []>} : vector<8x128xf32>, vector<128x128xf32>, vector<8x128xf32> -> vector<8x128xf32>
    %c0_9 = arith.constant 0 : index
    %c0_10 = arith.constant 0 : index
    %10 = vector.load %arg5[%c0_9, %c0_10] : memref<1x128xf32, #tpu.memory_space<vmem>>, vector<1x128xf32>
    %11 = vector.broadcast %10 : vector<1x128xf32> to vector<8x128xf32>
    %12 = arith.addf %9, %11 : vector<8x128xf32>
    %13 = arith.negf %12 : vector<8x128xf32>
    %14 = math.exp %13 : vector<8x128xf32>
    %cst_11 = arith.constant 1.000000e+00 : f32
    %15 = vector.broadcast %cst_11 : f32 to vector<8x128xf32>
    %16 = arith.addf %15, %14 : vector<8x128xf32>
    %17 = arith.divf %15, %16 : vector<8x128xf32>
    %c0_12 = arith.constant 0 : index
    %c0_13 = arith.constant 0 : index
    %18 = vector.load %arg6[%c0_12, %c0_13] : memref<8x128xf32, #tpu.memory_space<vmem>>, vector<8x128xf32>
    tpu.vector_store %arg6[%c0_12, %c0_13], %17 {strides = array<i32>} : memref<8x128xf32, #tpu.memory_space<vmem>>, vector<8x128xf32>,
    return
  }
  func.func @transform_0(%arg0: i32) -> (i32, i32) {
    %c0_i32 = arith.constant 0 : i32
    %c0_i32_0 = arith.constant 0 : i32
    return %arg0, %c0_i32 : i32, i32
  }
  func.func @transform_1(%arg0: i32) -> (i32, i32) {
    %c0_i32 = arith.constant 0 : i32
    %c0_i32_0 = arith.constant 0 : i32
    %c0_i32_1 = arith.constant 0 : i32
    return %c0_i32, %c0_i32_0 : i32, i32
  }
  func.func @transform_2(%arg0: i32) -> (i32, i32) {
    %c0_i32 = arith.constant 0 : i32
    %c0_i32_0 = arith.constant 0 : i32
    %c0_i32_1 = arith.constant 0 : i32
    return %c0_i32, %c0_i32_0 : i32, i32
  }
  func.func @transform_3(%arg0: i32) -> (i32, i32) {
    %c0_i32 = arith.constant 0 : i32
    %c0_i32_0 = arith.constant 0 : i32
    %c0_i32_1 = arith.constant 0 : i32
    return %c0_i32, %c0_i32_0 : i32, i32
  }
  func.func @transform_4(%arg0: i32) -> (i32, i32) {
    %c0_i32 = arith.constant 0 : i32
    %c0_i32_0 = arith.constant 0 : i32
    %c0_i32_1 = arith.constant 0 : i32
    return %c0_i32, %c0_i32_0 : i32, i32
  }
  func.func @transform_5(%arg0: i32) -> (i32, i32) {
    %c0_i32 = arith.constant 0 : i32
    %c0_i32_0 = arith.constant 0 : i32
    return %arg0, %c0_i32 : i32, i32
  }
}

</mosaic_0001>

<llo_original>
// kernel: patch_attention_forward.1
$region0: #{patch_attention_forward.1}
  #allocation0 [shape = 'u32[]', space=smem, size = 0x4, offset = 0x4, fixed_abs, tag = 'smem constant byte address 0x4 - core index']
  #allocation1 [shape = 'u32[144,128]{1,0:T(1,128)}', space=vmem, size = 0x12000, scoped, tag = 'internal scratch']
  %s0 = inlined_call_operand.vmem [shape: f32[8,128], index: 0, kind: input, shape index: {}]
  %s1 = inlined_call_operand.hbm [shape: f32[128,128], index: 1, kind: input, shape index: {}]
  %s2 = inlined_call_operand.vmem [shape: f32[1,128], index: 2, kind: input, shape index: {}]
  %s3 = inlined_call_operand.hbm [shape: f32[128,128], index: 3, kind: input, shape index: {}]
  %s4 = inlined_call_operand.vmem [shape: f32[1,128], index: 4, kind: input, shape index: {}]
  %s5 = inlined_call_operand.vmem [shape: f32[8,128], index: 5, kind: output, shape index: {}]
  %s6 = sld [smem:[#allocation0]]
  $region38: #{patch_attention_forward.1} parent=0
    _
  %s8 = ssub.s32 1, %s6
  %s9 = scalar_select 0, %s8, %s6
  $region1: #{patch_attention_forward.1} parent=0
    #allocation2 [shape = 'u8[65536]{0}', space=vmem, size = 0x10000, scoped, tag = 'input window, operand 1, single buffered']
    #allocation3 [shape = 's32[1]{0}', space=sflag, size = 0x4, scoped, tag = 'scoped memory for patch_attention_forward.1']
    #allocation4 [shape = 'u8[65536]{0}', space=vmem, size = 0x10000, scoped, tag = 'input window, operand 3, single buffered']
    #allocation5 [shape = 's32[1]{0}', space=sflag, size = 0x4, scoped, tag = 'scoped memory for patch_attention_forward.1']
    %10 = vsyncpa [#allocation3], 0
    %11 = vsyncpa [#allocation5], 0
    // Predicated region
    $region2: #{patch_attention_forward.1} parent=1 // pred_check
      _
    $region3: #{patch_attention_forward.1} parent=1 // pred_check_branch
      %13 = sbr.rel (0) target = $region5
    $region4: #{patch_attention_forward.1} parent=1 // pred_region
      _
    $region5: #{patch_attention_forward.1} parent=1 // pred_fallthru
      _
    // Predicated region
    $region6: #{patch_attention_forward.1} parent=1 // pred_check
      _
    $region7: #{patch_attention_forward.1} parent=1 // pred_check_branch
      %15 = sbr.rel (0) target = $region9
    $region8: #{patch_attention_forward.1} parent=1 // pred_region
      %s17 = ssub.s32 2048, 2048
      %18 = vsyncadd [#allocation3], %s17
      %s19 = sshll.u32 [#allocation2], 4
      %s20 = int_to_ptr.vmem [resolvable:$true] %s19
      %25 = dma.hbm_to_vmem [thread:$0]  %s1, 2048, %s20, [#allocation3], 128, 128, 8
    $region9: #{patch_attention_forward.1} parent=1 // pred_fallthru
      _
    // Predicated region
    $region10: #{patch_attention_forward.1} parent=1 // pred_check
      _
    $region11: #{patch_attention_forward.1} parent=1 // pred_check_branch
      %27 = sbr.rel (0) target = $region13
    $region12: #{patch_attention_forward.1} parent=1 // pred_region
      _
    $region13: #{patch_attention_forward.1} parent=1 // pred_fallthru
      _
    // Predicated region
    $region14: #{patch_attention_forward.1} parent=1 // pred_check
      _
    $region15: #{patch_attention_forward.1} parent=1 // pred_check_branch
      %29 = sbr.rel (0) target = $region17
    $region16: #{patch_attention_forward.1} parent=1 // pred_region
      %s31 = ssub.s32 2048, 2048
      %32 = vsyncadd [#allocation5], %s31
      %s33 = sshll.u32 [#allocation4], 4
      %s34 = int_to_ptr.vmem [resolvable:$true] %s33
      %39 = dma.hbm_to_vmem [thread:$0]  %s3, 2048, %s34, [#allocation5], 128, 128, 8
    $region17: #{patch_attention_forward.1} parent=1 // pred_fallthru
      _
    // Predicated region
    $region18: #{patch_attention_forward.1} parent=1 // pred_check
      _
    $region19: #{patch_attention_forward.1} parent=1 // pred_check_branch
      %41 = sbr.rel (0) target = $region21
    $region20: #{patch_attention_forward.1} parent=1 // pred_region
      _
    $region21: #{patch_attention_forward.1} parent=1 // pred_fallthru
      _
    // Predicated region
    $region22: #{patch_attention_forward.1} parent=1 // pred_check
      _
    $region23: #{patch_attention_forward.1} parent=1 // pred_check_branch
      %43 = sbr.rel (0) target = $region25
    $region24: #{patch_attention_forward.1} parent=1 // pred_region
      %44 = dma.done [#allocation3], 2048
    $region25: #{patch_attention_forward.1} parent=1 // pred_fallthru
      _
    // Predicated region
    $region26: #{patch_attention_forward.1} parent=1 // pred_check
      _
    $region27: #{patch_attention_forward.1} parent=1 // pred_check_branch
      %46 = sbr.rel (0) target = $region29
    $region28: #{patch_attention_forward.1} parent=1 // pred_region
      %47 = dma.done [#allocation5], 2048
    $region29: #{patch_attention_forward.1} parent=1 // pred_fallthru
      _
    %v48 = vld [vmem:[%s0] sm:$0xff]
    %v49 = vld [vmem:[#allocation2] sm:$0xff]
    %v50 = vld [vmem:[#allocation2 + $0x8] sm:$0xff]
    %v51 = vld [vmem:[#allocation2 + $0x10] sm:$0xff]
    %v52 = vld [vmem:[#allocation2 + $0x18] sm:$0xff]
    %v53 = vld [vmem:[#allocation2 + $0x20] sm:$0xff]
    %v54 = vld [vmem:[#allocation2 + $0x28] sm:$0xff]
    %v55 = vld [vmem:[#allocation2 + $0x30] sm:$0xff]
    %v56 = vld [vmem:[#allocation2 + $0x38] sm:$0xff]
    %v57 = vld [vmem:[#allocation2 + $0x40] sm:$0xff]
    %v58 = vld [vmem:[#allocation2 + $0x48] sm:$0xff]
    %v59 = vld [vmem:[#allocation2 + $0x50] sm:$0xff]
    %v60 = vld [vmem:[#allocation2 + $0x58] sm:$0xff]
    %v61 = vld [vmem:[#allocation2 + $0x60] sm:$0xff]
    %v62 = vld [vmem:[#allocation2 + $0x68] sm:$0xff]
    %v63 = vld [vmem:[#allocation2 + $0x70] sm:$0xff]
    %v64 = vld [vmem:[#allocation2 + $0x78] sm:$0xff]
    %v65 = vld [vmem:[%s2] sm:$0x1]
    %v67 = vlaneseq
    %v68 = vshrl.u32 %v67, 7
    %v69 = vsub.s32 0, %v68
    %v70 = vrot.slane %v65, %v69
    %72 = vmatprep.subr.mxu0 0.0
    %73 = vmatpush1.msra.mxu0 %v49
    %74 = vmatprep.subr.mxu0 0.0
    %75 = vmatpush1.msra.mxu0 %v50
    %76 = vmatprep.subr.mxu0 0.0
    %77 = vmatpush1.msra.mxu0 %v51
    %78 = vmatprep.subr.mxu0 0.0
    %79 = vmatpush1.msra.mxu0 %v52
    %80 = vmatprep.subr.mxu0 0.0
    %81 = vmatpush1.msra.mxu0 %v53
    %82 = vmatprep.subr.mxu0 0.0
    %83 = vmatpush1.msra.mxu0 %v54
    %84 = vmatprep.subr.mxu0 0.0
    %85 = vmatpush1.msra.mxu0 %v55
    %86 = vmatprep.subr.mxu0 0.0
    %87 = vmatpush1.msra.mxu0 %v56
    %88 = vmatprep.subr.mxu0 0.0
    %89 = vmatpush1.msra.mxu0 %v57
    %90 = vmatprep.subr.mxu0 0.0
    %91 = vmatpush1.msra.mxu0 %v58
    %92 = vmatprep.subr.mxu0 0.0
    %93 = vmatpush1.msra.mxu0 %v59
    %94 = vmatprep.subr.mxu0 0.0
    %95 = vmatpush1.msra.mxu0 %v60
    %96 = vmatprep.subr.mxu0 0.0
    %97 = vmatpush1.msra.mxu0 %v61
    %98 = vmatprep.subr.mxu0 0.0
    %99 = vmatpush1.msra.mxu0 %v62
    %100 = vmatprep.subr.mxu0 0.0
    %101 = vmatpush1.msra.mxu0 %v63
    %102 = vmatprep.subr.mxu0 0.0
    %103 = vmatpush1.msra.mxu0 %v64
    %104 = vmatprep.subr.mxu0 0.0
    %105 = vmatpush1.msra.mxu0 0.0
    %106 = vmatprep.subr.mxu0 0.0
    %107 = vmatpush1.msra.mxu0 0.0
    %108 = vmatprep.subr.mxu0 0.0
    %109 = vmatpush1.msra.mxu0 0.0
    %110 = vmatprep.subr.mxu0 0.0
    %111 = vmatpush1.msra.mxu0 0.0
    %112 = vmatprep.subr.mxu0 0.0
    %113 = vmatpush1.msra.mxu0 0.0
    %114 = vmatprep.subr.mxu0 0.0
    %115 = vmatpush1.msra.mxu0 0.0
    %116 = vmatprep.subr.mxu0 0.0
    %117 = vmatpush1.msra.mxu0 0.0
    %118 = vmatprep.subr.mxu0 0.0
    %119 = vmatpush1.msra.mxu0 0.0
    %120 = vmatprep.subr.mxu0 0.0
    %121 = vmatpush1.msra.mxu0 0.0
    %122 = vmatprep.subr.mxu0 0.0
    %123 = vmatpush1.msra.mxu0 0.0
    %124 = vmatprep.subr.mxu0 0.0
    %125 = vmatpush1.msra.mxu0 0.0
    %126 = vmatprep.subr.mxu0 0.0
    %127 = vmatpush1.msra.mxu0 0.0
    %128 = vmatprep.subr.mxu0 0.0
    %129 = vmatpush1.msra.mxu0 0.0
    %130 = vmatprep.subr.mxu0 0.0
    %131 = vmatpush1.msra.mxu0 0.0
    %132 = vmatprep.subr.mxu0 0.0
    %133 = vmatpush1.msra.mxu0 0.0
    %134 = vmatprep.subr.mxu0 0.0
    %135 = vmatpush1.msra.mxu0 0.0
    %136 = vmatprep.mubr.f32.mxu0 0.0
    %137 = vmatmul.mubr.f32.gmra.mrb[0].mxu0 %v48
    %v138 = vpop.f32.mrb[0].mxu0
    %v139 = vadd.f32 %v70, %v138
    %v140 = vpop.f32.mrb[0].mxu0
    %141 = vdwg.mxu0
    %v142 = vmax.f32 %v139, 0.0
    %v143 = vld [vmem:[#allocation4] sm:$0xff]
    %v144 = vld [vmem:[#allocation4 + $0x8] sm:$0xff]
    %v145 = vld [vmem:[#allocation4 + $0x10] sm:$0xff]
    %v146 = vld [vmem:[#allocation4 + $0x18] sm:$0xff]
    %v147 = vld [vmem:[#allocation4 + $0x20] sm:$0xff]
    %v148 = vld [vmem:[#allocation4 + $0x28] sm:$0xff]
    %v149 = vld [vmem:[#allocation4 + $0x30] sm:$0xff]
    %v150 = vld [vmem:[#allocation4 + $0x38] sm:$0xff]
    %v151 = vld [vmem:[#allocation4 + $0x40] sm:$0xff]
    %v152 = vld [vmem:[#allocation4 + $0x48] sm:$0xff]
    %v153 = vld [vmem:[#allocation4 + $0x50] sm:$0xff]
    %v154 = vld [vmem:[#allocation4 + $0x58] sm:$0xff]
    %v155 = vld [vmem:[#allocation4 + $0x60] sm:$0xff]
    %v156 = vld [vmem:[#allocation4 + $0x68] sm:$0xff]
    %v157 = vld [vmem:[#allocation4 + $0x70] sm:$0xff]
    %v158 = vld [vmem:[#allocation4 + $0x78] sm:$0xff]
    %v159 = vld [vmem:[%s4] sm:$0x1]
    %v161 = vlaneseq
    %v162 = vshrl.u32 %v161, 7
    %v163 = vsub.s32 0, %v162
    %v164 = vrot.slane %v159, %v163
    %166 = vmatprep.subr.mxu0 0.0
    %167 = vmatpush1.msra.mxu0 %v143
    %168 = vmatprep.subr.mxu0 0.0
    %169 = vmatpush1.msra.mxu0 %v144
    %170 = vmatprep.subr.mxu0 0.0
    %171 = vmatpush1.msra.mxu0 %v145
    %172 = vmatprep.subr.mxu0 0.0
    %173 = vmatpush1.msra.mxu0 %v146
    %174 = vmatprep.subr.mxu0 0.0
    %175 = vmatpush1.msra.mxu0 %v147
    %176 = vmatprep.subr.mxu0 0.0
    %177 = vmatpush1.msra.mxu0 %v148
    %178 = vmatprep.subr.mxu0 0.0
    %179 = vmatpush1.msra.mxu0 %v149
    %180 = vmatprep.subr.mxu0 0.0
    %181 = vmatpush1.msra.mxu0 %v150
    %182 = vmatprep.subr.mxu0 0.0
    %183 = vmatpush1.msra.mxu0 %v151
    %184 = vmatprep.subr.mxu0 0.0
    %185 = vmatpush1.msra.mxu0 %v152
    %186 = vmatprep.subr.mxu0 0.0
    %187 = vmatpush1.msra.mxu0 %v153
    %188 = vmatprep.subr.mxu0 0.0
    %189 = vmatpush1.msra.mxu0 %v154
    %190 = vmatprep.subr.mxu0 0.0
    %191 = vmatpush1.msra.mxu0 %v155
    %192 = vmatprep.subr.mxu0 0.0
    %193 = vmatpush1.msra.mxu0 %v156
    %194 = vmatprep.subr.mxu0 0.0
    %195 = vmatpush1.msra.mxu0 %v157
    %196 = vmatprep.subr.mxu0 0.0
    %197 = vmatpush1.msra.mxu0 %v158
    %198 = vmatprep.subr.mxu0 0.0
    %199 = vmatpush1.msra.mxu0 0.0
    %200 = vmatprep.subr.mxu0 0.0
    %201 = vmatpush1.msra.mxu0 0.0
    %202 = vmatprep.subr.mxu0 0.0
    %203 = vmatpush1.msra.mxu0 0.0
    %204 = vmatprep.subr.mxu0 0.0
    %205 = vmatpush1.msra.mxu0 0.0
    %206 = vmatprep.subr.mxu0 0.0
    %207 = vmatpush1.msra.mxu0 0.0
    %208 = vmatprep.subr.mxu0 0.0
    %209 = vmatpush1.msra.mxu0 0.0
    %210 = vmatprep.subr.mxu0 0.0
    %211 = vmatpush1.msra.mxu0 0.0
    %212 = vmatprep.subr.mxu0 0.0
    %213 = vmatpush1.msra.mxu0 0.0
    %214 = vmatprep.subr.mxu0 0.0
    %215 = vmatpush1.msra.mxu0 0.0
    %216 = vmatprep.subr.mxu0 0.0
    %217 = vmatpush1.msra.mxu0 0.0
    %218 = vmatprep.subr.mxu0 0.0
    %219 = vmatpush1.msra.mxu0 0.0
    %220 = vmatprep.subr.mxu0 0.0
    %221 = vmatpush1.msra.mxu0 0.0
    %222 = vmatprep.subr.mxu0 0.0
    %223 = vmatpush1.msra.mxu0 0.0
    %224 = vmatprep.subr.mxu0 0.0
    %225 = vmatpush1.msra.mxu0 0.0
    %226 = vmatprep.subr.mxu0 0.0
    %227 = vmatpush1.msra.mxu0 0.0
    %228 = vmatprep.subr.mxu0 0.0
    %229 = vmatpush1.msra.mxu0 0.0
    %230 = vmatprep.mubr.f32.mxu0 0.0
    %231 = vmatmul.mubr.f32.gmra.mrb[0].mxu0 %v142
    %v232 = vpop.f32.mrb[0].mxu0
    %v233 = vadd.f32 %v164, %v232
    %v234 = vpop.f32.mrb[0].mxu0
    %235 = vdwg.mxu0
    %v236 = vxor.u32 %v233, 2147483648
    %v237 = vmul.f32 %v236, 1.442695
    %v238 = vpow.pop %v237
    %v239 = vadd.f32 %v238, 1.0
    %v240 = vrcp.pop %v239
    %v241 = vmul.f32 1.0, %v240
    %242 = vst [vmem:[%s5] sm:$0xff] %v241
    // Predicated region
    $region30: #{patch_attention_forward.1} parent=1 // pred_check
      _
    $region31: #{patch_attention_forward.1} parent=1 // pred_check_branch
      %244 = sbr.rel (0) target = $region33
    $region32: #{patch_attention_forward.1} parent=1 // pred_region
      _
    $region33: #{patch_attention_forward.1} parent=1 // pred_fallthru
      _
    // Predicated region
    $region34: #{patch_attention_forward.1} parent=1 // pred_check
      _
    $region35: #{patch_attention_forward.1} parent=1 // pred_check_branch
      %246 = sbr.rel (0) target = $region37
    $region36: #{patch_attention_forward.1} parent=1 // pred_region
      _
    $region37: #{patch_attention_forward.1} parent=1 // pred_fallthru
      _
    %247 = vsyncpa [#allocation3], 1
    %248 = vsyncpa [#allocation5], 1

</llo_original>
